<compile_context>
chip_gen: v7x
topology: tpu7x:2x2x1
jax: 0.10.0
libtpu: 0.0.40
codegen_flags: <defaults>
</compile_context>

<pallas_src>
import functools
import math

import jax
import jax.numpy as jnp
from jax.experimental import pallas as pl
from jax.experimental.pallas import tpu as pltpu

_SQRT_HALF = 1.0 / math.sqrt(2.0)


def _gelu_f32(x):
    # Exact (erf-based) GELU — matches torch.nn.functional.gelu / nn.GELU() defaults.
    return 0.5 * x * (1.0 + jax.lax.erf(x * _SQRT_HALF))


def _round_up(x, m):
    return ((x + m - 1) // m) * m


def _chip_config():
    """Generation-aware tile / VMEM-limit defaults.

    Compute-bound thresholds (flops/byte): v5e ~240, v7x ~310, v6e ~650.
    AI per grid step = tm*tn/(tm+tn)."""
    kind = ""
    try:
        kind = jax.devices()[0].device_kind.lower()
    except Exception:
        pass
    if "v6" in kind:
        # 918 TF/s vs ~1.4 TB/s -> need ~1536-wide tiles; 128 MiB physical VMEM.
        # GEGLU footprint @ 1536x1536x2048: ~63 MiB (fits the 100 MiB cap).
        return dict(tile_m=1536, tile_n=1536, tile_k=2048, step=256,
                    vmem_limit=100 * 1024 * 1024)
    if "7" in kind:
        # v7x: only 64 MiB VMEM -> keep footprint < ~56 MiB; AI=512 >= ~310.
        return dict(tile_m=1024, tile_n=1024, tile_k=2048, step=256,
                    vmem_limit=56 * 1024 * 1024)
    if "v5" in kind:
        # v5e: AI=256 >= ~240 suffices; MXU is 4x128^2 so 128-step tiles.
        return dict(tile_m=512, tile_n=512, tile_k=1024, step=128,
                    vmem_limit=48 * 1024 * 1024)
    # Unknown generation: moderate tiles that fit every generation's VMEM.
    return dict(tile_m=512, tile_n=512, tile_k=1024, step=128,
                vmem_limit=48 * 1024 * 1024)


def _pick_tile(dim, want, step=128):
    """Largest `step`-multiple tile <= want that evenly divides dim; falls back
    to 128-multiples, then the full dim (small / oddly shaped dims)."""
    if dim <= want:
        return dim
    for s in sorted({step, 128}, reverse=True):
        t = (want // s) * s
        while t >= s:
            if dim % t == 0:
                return t
            t -= s
    # TODO(synk): for huge dims with no 128-multiple divisor, pad N/K instead
    # of falling back to the full dimension (can exceed the VMEM limit).
    return dim


# ---------------------------------------------------------------------------
# kernels
# ---------------------------------------------------------------------------
def _linear_kernel(x_ref, w_ref, b_ref, o_ref, acc_ref, *, activation):
    """o = act(x @ w + b), grid (M, N, K), f32 accumulator, epilogue on last K."""
    k = pl.program_id(2)

    @pl.when(k == 0)
    def _():
        acc_ref[...] = jnp.zeros_like(acc_ref)

    acc_ref[...] += jnp.dot(x_ref[...], w_ref[...],
                            preferred_element_type=jnp.float32)

    @pl.when(k == pl.num_programs(2) - 1)
    def _():
        y = acc_ref[...] + b_ref[...].astype(jnp.float32)
        if activation == "gelu":
            y = _gelu_f32(y)
        o_ref[...] = y.astype(o_ref.dtype)


def _geglu_kernel(x_ref, wv_ref, wg_ref, bv_ref, bg_ref, o_ref,
                  accv_ref, accg_ref):
    """Fused GEGLU: value/gate weights as separate operands, two f32
    accumulators; on the last K step apply  o = v * gelu(g)."""
    k = pl.program_id(2)

    @pl.when(k == 0)
    def _():
        accv_ref[...] = jnp.zeros_like(accv_ref)
        accg_ref[...] = jnp.zeros_like(accg_ref)

    x = x_ref[...]
    accv_ref[...] += jnp.dot(x, wv_ref[...], preferred_element_type=jnp.float32)
    accg_ref[...] += jnp.dot(x, wg_ref[...], preferred_element_type=jnp.float32)

    @pl.when(k == pl.num_programs(2) - 1)
    def _():
        v = accv_ref[...] + bv_ref[...].astype(jnp.float32)
        g = accg_ref[...] + bg_ref[...].astype(jnp.float32)
        o_ref[...] = (v * _gelu_f32(g)).astype(o_ref.dtype)


# ---------------------------------------------------------------------------
# pallas_call wrappers
# ---------------------------------------------------------------------------
def _linear_pallas(x2, w, b, *, activation, out_dtype, tm, tn, tk, vmem_limit):
    M_pad, K = x2.shape
    N = w.shape[1]
    gm, gn, gk = M_pad // tm, N // tn, K // tk

    flops = 2 * M_pad * K * N
    # Tiled HBM traffic: x re-streamed once per N-tile, w once per M-tile.
    bytes_accessed = int(
        x2.size * x2.dtype.itemsize * gn
        + w.size * w.dtype.itemsize * gm
        + b.size * b.dtype.itemsize * gm
        + M_pad * N * jnp.dtype(out_dtype).itemsize)
    transcendentals = M_pad * N if activation == "gelu" else 0

    return pl.pallas_call(
        functools.partial(_linear_kernel, activation=activation),
        out_shape=jax.ShapeDtypeStruct((M_pad, N), out_dtype),
        grid_spec=pltpu.PrefetchScalarGridSpec(
            num_scalar_prefetch=0,
            grid=(gm, gn, gk),
            in_specs=[
                pl.BlockSpec((tm, tk), lambda i, j, k: (i, k)),
                pl.BlockSpec((tk, tn), lambda i, j, k: (k, j)),
                pl.BlockSpec((1, tn), lambda i, j, k: (0, j)),
            ],
            out_specs=pl.BlockSpec((tm, tn), lambda i, j, k: (i, j)),
            scratch_shapes=[pltpu.VMEM((tm, tn), jnp.float32)],
        ),
        compiler_params=pltpu.CompilerParams(
            dimension_semantics=("parallel", "parallel", "arbitrary"),
            vmem_limit_bytes=vmem_limit,
        ),
        cost_estimate=pl.CostEstimate(
            flops=flops, transcendentals=transcendentals,
            bytes_accessed=bytes_accessed),
    )(x2, w, b)


def _geglu_pallas(x2, wv, wg, bv, bg, *, out_dtype, tm, tn, tk, vmem_limit):
    M_pad, K = x2.shape
    inner = wv.shape[1]
    gm, gn, gk = M_pad // tm, inner // tn, K // tk

    flops = 2 * M_pad * K * (2 * inner)
    bytes_accessed = int(
        x2.size * x2.dtype.itemsize * gn
        + (wv.size + wg.size) * wv.dtype.itemsize * gm
        + (bv.size + bg.size) * bv.dtype.itemsize * gm
        + M_pad * inner * jnp.dtype(out_dtype).itemsize)
    transcendentals = M_pad * inner

    return pl.pallas_call(
        _geglu_kernel,
        out_shape=jax.ShapeDtypeStruct((M_pad, inner), out_dtype),
        grid_spec=pltpu.PrefetchScalarGridSpec(
            num_scalar_prefetch=0,
            grid=(gm, gn, gk),
            in_specs=[
                pl.BlockSpec((tm, tk), lambda i, j, k: (i, k)),
                pl.BlockSpec((tk, tn), lambda i, j, k: (k, j)),
                pl.BlockSpec((tk, tn), lambda i, j, k: (k, j)),
                pl.BlockSpec((1, tn), lambda i, j, k: (0, j)),
                pl.BlockSpec((1, tn), lambda i, j, k: (0, j)),
            ],
            out_specs=pl.BlockSpec((tm, tn), lambda i, j, k: (i, j)),
            scratch_shapes=[pltpu.VMEM((tm, tn), jnp.float32),
                            pltpu.VMEM((tm, tn), jnp.float32)],
        ),
        compiler_params=pltpu.CompilerParams(
            dimension_semantics=("parallel", "parallel", "arbitrary"),
            vmem_limit_bytes=vmem_limit,
        ),
        cost_estimate=pl.CostEstimate(
            flops=flops, transcendentals=transcendentals,
            bytes_accessed=bytes_accessed),
    )(x2, wv, wg, bv, bg)


# ---------------------------------------------------------------------------
# parameter preparation (one-time, outside the hot path) + forward pass
# ---------------------------------------------------------------------------
def prepare_feedforward_params(w1, b1, w2, b2, *, glu,
                               compute_dtype=jnp.bfloat16):
    """Convert PyTorch-layout weights once: transpose to (in, out) and cast to
    bf16. For GEGLU the value / gate halves are kept as two separate weight /
    bias arrays (no prepare-time column interleave), so the N tile can be
    chosen per-generation at call time.

    w1: (proj_out, dim), b1: (proj_out,), w2: (dim_out, inner), b2: (dim_out,)
    """
    dim_in = w1.shape[1]
    dim_out, inner = w2.shape

    w1_t = jnp.asarray(w1).T.astype(compute_dtype)            # (dim_in, proj_out)
    b1_f = jnp.asarray(b1).astype(jnp.float32).reshape(1, -1)
    w2_t = jnp.asarray(w2).T.astype(compute_dtype)            # (inner, dim_out)
    b2_f = jnp.asarray(b2).astype(jnp.float32).reshape(1, -1)

    params = dict(glu=glu, w2=w2_t, b2=b2_f,
                  dim_in=dim_in, inner_dim=inner, dim_out=dim_out,
                  compute_dtype=compute_dtype)
    if glu:
        assert w1_t.shape[1] == 2 * inner
        params.update(w1_v=w1_t[:, :inner], w1_g=w1_t[:, inner:],
                      b1_v=b1_f[:, :inner], b1_g=b1_f[:, inner:])
    else:
        assert w1_t.shape[1] == inner
        params.update(w1=w1_t, b1=b1_f)
    return params


def feedforward(x, params, *, tile_m=None, tile_n=None, tile_k=None):
    """FeedForward forward pass: x (..., dim_in) -> (..., dim_out)."""
    cfg = _chip_config()
    tile_m = cfg["tile_m"] if tile_m is None else tile_m
    tile_n = cfg["tile_n"] if tile_n is None else tile_n
    tile_k = cfg["tile_k"] if tile_k is None else tile_k
    step = cfg["step"]
    vmem_limit = cfg["vmem_limit"]

    orig_shape = x.shape
    assert orig_shape[-1] == params["dim_in"]
    M = math.prod(orig_shape[:-1])
    cdtype = params["compute_dtype"]
    dim_in = params["dim_in"]
    inner = params["inner_dim"]
    dim_out = params["dim_out"]

    x2 = x.reshape(M, dim_in).astype(cdtype)

    # rows -> sublanes: bf16 native tile is (16, 128), so the row tile is a
    # multiple of 16; skip padding / trailing slice when M already divides.
    tm = tile_m if M >= tile_m else _round_up(M, 16)
    M_pad = _round_up(M, tm)
    if M_pad != M:
        x2 = jnp.pad(x2, ((0, M_pad - M), (0, 0)))

    tk1 = _pick_tile(dim_in, tile_k, step)
    tn1 = _pick_tile(inner, tile_n, step)
    tk2 = _pick_tile(inner, tile_k, step)
    tn2 = _pick_tile(dim_out, tile_n, step)

    if params["glu"]:
        h = _geglu_pallas(x2, params["w1_v"], params["w1_g"],
                          params["b1_v"], params["b1_g"],
                          out_dtype=cdtype, tm=tm, tn=tn1, tk=tk1,
                          vmem_limit=vmem_limit)
    else:
        h = _linear_pallas(x2, params["w1"], params["b1"], activation="gelu",
                           out_dtype=cdtype, tm=tm, tn=tn1, tk=tk1,
                           vmem_limit=vmem_limit)

    # TODO(synk): Dropout with p>0 in training mode not implemented — identity
    # for the module default p=0.0 / inference.
    # TODO(synk): optionally fuse both GEMMs into one pallas_call per M
    # row-block (keep the (tm, inner) hidden tile in VMEM) to skip the HBM
    # round-trip of h — biggest relative win on v5e/v6e.

    out = _linear_pallas(h, params["w2"], params["b2"], activation=None,
                         out_dtype=x.dtype, tm=tm, tn=tn2, tk=tk2,
                         vmem_limit=vmem_limit)
    if M_pad != M:
        out = out[:M]
    return out.reshape(*orig_shape[:-1], dim_out)


# ---------------------------------------------------------------------------
# pure-JAX reference (mirrors kernel numerics: bf16 operands, f32 accumulate)
# ---------------------------------------------------------------------------
def feedforward_reference(x, w1, b1, w2, b2, *, glu, compute_dtype=jnp.bfloat16):
    cd = compute_dtype
    h = jnp.einsum("...d,od->...o", x.astype(cd), jnp.asarray(w1).astype(cd),
                   preferred_element_type=jnp.float32)
    h = h + jnp.asarray(b1).astype(jnp.float32)
    if glu:
        inner = w1.shape[0] // 2
        v, g = h[..., :inner], h[..., inner:]
        h = v * _gelu_f32(g)
    else:
        h = _gelu_f32(h)
    h = h.astype(cd)
    out = jnp.einsum("...d,od->...o", h, jnp.asarray(w2).astype(cd),
                     preferred_element_type=jnp.float32)
    out = out + jnp.asarray(b2).astype(jnp.float32)
    return out.astype(x.dtype)


if __name__ == "__main__":
    key = jax.random.PRNGKey(0)
    B, S, dim, mult = 2, 8, 32, 4
    inner = int(dim * mult)      # 128
    dim_out = dim                # default(dim_out, dim)

    kx, kw1, kb1, kw2, kb2 = jax.random.split(key, 5)
    x = jax.random.normal(kx, (B, S, dim), dtype=jnp.float32)

    for glu in (False, True):
        proj_out = 2 * inner if glu else inner
        bnd1 = 1.0 / math.sqrt(dim)     # nn.Linear default init bounds
        bnd2 = 1.0 / math.sqrt(inner)
        w1 = jax.random.uniform(kw1, (proj_out, dim), minval=-bnd1, maxval=bnd1,
                                dtype=jnp.float32)
        b1 = jax.random.uniform(kb1, (proj_out,), minval=-bnd1, maxval=bnd1,
                                dtype=jnp.float32)
        w2 = jax.random.uniform(kw2, (dim_out, inner), minval=-bnd2, maxval=bnd2,
                                dtype=jnp.float32)
        b2 = jax.random.uniform(kb2, (dim_out,), minval=-bnd2, maxval=bnd2,
                                dtype=jnp.float32)

        params = prepare_feedforward_params(w1, b1, w2, b2, glu=glu)
        out = jax.block_until_ready(feedforward(x, params))
        ref = feedforward_reference(x, w1, b1, w2, b2, glu=glu)

        assert out.shape == (B, S, dim_out)
        err = float(jnp.max(jnp.abs(out - ref)))
        assert err < 2e-2, f"glu={glu}: max abs err {err}"

    print("KERNEL_OK")
</pallas_src>

<mosaic_0001>
module attributes {stable_mosaic.version = 11 : i64} {
  func.func @_linear_kernel(%arg0: i32, %arg1: i32, %arg2: i32, %arg3: memref<16x32xbf16, #tpu.memory_space<vmem>>, %arg4: memref<32x128xbf16, #tpu.memory_space<vmem>>, %arg5: memref<1x128xf32, #tpu.memory_space<vmem>>, %arg6: memref<16x128xbf16, #tpu.memory_space<vmem>>, %arg7: memref<16x128xf32, #tpu.memory_space<vmem>>) attributes {dimension_semantics = [#tpu.dimension_semantics<parallel>, #tpu.dimension_semantics<parallel>, #tpu.dimension_semantics<arbitrary>], iteration_bounds = array<i64: 1, 1, 1>, scalar_prefetch = 0 : i64, scratch_operands = 1 : i64, tpu.core_type = #tpu.core_type<tc>, window_params = [{transform_indices = @transform_0, window_bounds = array<i64: 16, 32>}, {transform_indices = @transform_1, window_bounds = array<i64: 32, 128>}, {transform_indices = @transform_2, window_bounds = array<i64: 1, 128>}, {transform_indices = @transform_3, window_bounds = array<i64: 16, 128>}]} {
    %c0_i32 = arith.constant 0 : i32
    %0 = arith.cmpi eq, %arg2, %c0_i32 : i32
    %1 = arith.extui %0 : i1 to i32
    %c0_i32_0 = arith.constant 0 : i32
    %2 = arith.cmpi ne, %1, %c0_i32_0 : i32
    scf.if %2 {
      %cst_10 = arith.constant 0.000000e+00 : f32
      %12 = vector.broadcast %cst_10 : f32 to vector<16x128xf32>
      %c0_11 = arith.constant 0 : index
      %c0_12 = arith.constant 0 : index
      %13 = vector.load %arg7[%c0_11, %c0_12] : memref<16x128xf32, #tpu.memory_space<vmem>>, vector<16x128xf32>
      tpu.vector_store %arg7[%c0_11, %c0_12], %12 {strides = array<i32>} : memref<16x128xf32, #tpu.memory_space<vmem>>, vector<16x128xf32>,
    } else {
    }
    %c0 = arith.constant 0 : index
    %c0_1 = arith.constant 0 : index
    %3 = vector.load %arg7[%c0, %c0_1] : memref<16x128xf32, #tpu.memory_space<vmem>>, vector<16x128xf32>
    %c0_2 = arith.constant 0 : index
    %c0_3 = arith.constant 0 : index
    %4 = vector.load %arg3[%c0_2, %c0_3] : memref<16x32xbf16, #tpu.memory_space<vmem>>, vector<16x32xbf16>
    %c0_4 = arith.constant 0 : index
    %c0_5 = arith.constant 0 : index
    %5 = vector.load %arg4[%c0_4, %c0_5] : memref<32x128xbf16, #tpu.memory_space<vmem>>, vector<32x128xbf16>
    %cst = arith.constant dense<0.000000e+00> : vector<16x128xf32>
    %6 = tpu.matmul %4, %5, %cst {dimension_numbers = #tpu.dot_dimension_numbers<[1], [0], [0], [1], [0, 0, 1, 1], [], []>} : vector<16x32xbf16>, vector<32x128xbf16>, vector<16x128xf32> -> vector<16x128xf32>
    %7 = arith.addf %3, %6 : vector<16x128xf32>
    %c0_6 = arith.constant 0 : index
    %c0_7 = arith.constant 0 : index
    %8 = vector.load %arg7[%c0_6, %c0_7] : memref<16x128xf32, #tpu.memory_space<vmem>>, vector<16x128xf32>
    tpu.vector_store %arg7[%c0_6, %c0_7], %7 {strides = array<i32>} : memref<16x128xf32, #tpu.memory_space<vmem>>, vector<16x128xf32>,
    %c0_i32_8 = arith.constant 0 : i32
    %9 = arith.cmpi eq, %arg2, %c0_i32_8 : i32
    %10 = arith.extui %9 : i1 to i32
    %c0_i32_9 = arith.constant 0 : i32
    %11 = arith.cmpi ne, %10, %c0_i32_9 : i32
    scf.if %11 {
      %c0_10 = arith.constant 0 : index
      %c0_11 = arith.constant 0 : index
      %12 = vector.load %arg7[%c0_10, %c0_11] : memref<16x128xf32, #tpu.memory_space<vmem>>, vector<16x128xf32>
      %c0_12 = arith.constant 0 : index
      %c0_13 = arith.constant 0 : index
      %13 = vector.load %arg5[%c0_12, %c0_13] : memref<1x128xf32, #tpu.memory_space<vmem>>, vector<1x128xf32>
      %14 = vector.broadcast %13 : vector<1x128xf32> to vector<16x128xf32>
      %15 = arith.addf %12, %14 : vector<16x128xf32>
      %cst_14 = arith.constant 5.000000e-01 : f32
      %16 = vector.broadcast %cst_14 : f32 to vector<16x128xf32>
      %17 = arith.mulf %16, %15 : vector<16x128xf32>
      %cst_15 = arith.constant 0.707106769 : f32
      %18 = vector.broadcast %cst_15 : f32 to vector<16x128xf32>
      %19 = arith.mulf %15, %18 : vector<16x128xf32>
      %20 = math.erf %19 : vector<16x128xf32>
      %cst_16 = arith.constant 1.000000e+00 : f32
      %21 = vector.broadcast %cst_16 : f32 to vector<16x128xf32>
      %22 = arith.addf %21, %20 : vector<16x128xf32>
      %23 = arith.mulf %17, %22 : vector<16x128xf32>
      %24 = arith.truncf %23 : vector<16x128xf32> to vector<16x128xbf16>
      %c0_17 = arith.constant 0 : index
      %c0_18 = arith.constant 0 : index
      %25 = vector.load %arg6[%c0_17, %c0_18] : memref<16x128xbf16, #tpu.memory_space<vmem>>, vector<16x128xbf16>
      tpu.vector_store %arg6[%c0_17, %c0_18], %24 {strides = array<i32>} : memref<16x128xbf16, #tpu.memory_space<vmem>>, vector<16x128xbf16>,
    } else {
    }
    return
  }
  func.func @transform_0(%arg0: i32, %arg1: i32, %arg2: i32) -> (i32, i32) {
    %c0_i32 = arith.constant 0 : i32
    return %arg0, %arg2 : i32, i32
  }
  func.func @transform_1(%arg0: i32, %arg1: i32, %arg2: i32) -> (i32, i32) {
    %c0_i32 = arith.constant 0 : i32
    return %arg2, %arg1 : i32, i32
  }
  func.func @transform_2(%arg0: i32, %arg1: i32, %arg2: i32) -> (i32, i32) {
    %c0_i32 = arith.constant 0 : i32
    %c0_i32_0 = arith.constant 0 : i32
    return %c0_i32, %arg1 : i32, i32
  }
  func.func @transform_3(%arg0: i32, %arg1: i32, %arg2: i32) -> (i32, i32) {
    %c0_i32 = arith.constant 0 : i32
    return %arg0, %arg1 : i32, i32
  }
}

</mosaic_0001>

<llo_original>
// kernel: tpu_custom_call.1
$region0: #{tpu_custom_call.1}
  #allocation0 [shape = 'u32[]', space=smem, size = 0x4, offset = 0x4, fixed_abs, tag = 'smem constant byte address 0x4 - core index']
  #allocation1 [shape = 'u32[144,128]{1,0:T(1,128)}', space=vmem, size = 0x12000, scoped, tag = 'internal scratch']
  #allocation2 [shape = 'f32[16,128]{1,0:T(8,128)}', space=vmem, size = 0x2000, scoped, tag = 'scratch operand']
  %s0 = inlined_call_operand.hbm [shape: bf16[16,32], index: 0, kind: input, shape index: {}]
  %s1 = inlined_call_operand.hbm [shape: bf16[32,128], index: 1, kind: input, shape index: {}]
  %s2 = inlined_call_operand.vmem [shape: f32[1,128], index: 2, kind: input, shape index: {}]
  %s3 = inlined_call_operand.hbm [shape: bf16[16,128], index: 3, kind: output, shape index: {}]
  %s4 = sld [smem:[#allocation0]]
  $region38: #{tpu_custom_call.1} parent=0
    _
  %s6 = ssub.s32 1, %s4
  %s7 = scalar_select 0, %s6, %s4
  $region1: #{tpu_custom_call.1} parent=0
    #allocation3 [shape = 'u8[4096]{0}', space=vmem, size = 0x1000, scoped, tag = 'input window, operand 0, single buffered']
    #allocation4 [shape = 's32[1]{0}', space=sflag, size = 0x4, scoped, tag = 'scoped memory for tpu_custom_call.1']
    #allocation5 [shape = 's32[1]{0}', space=sflag, size = 0x4, scoped, tag = 'scoped memory for tpu_custom_call.1']
    #allocation6 [shape = 'u8[8192]{0}', space=vmem, size = 0x2000, scoped, tag = 'input window, operand 1, single buffered']
    #allocation7 [shape = 's32[1]{0}', space=sflag, size = 0x4, scoped, tag = 'scoped memory for tpu_custom_call.1']
    #allocation8 [shape = 'u8[4096]{0}', space=vmem, size = 0x1000, scoped, tag = 'output window, operand 0, single buffered']
    %8 = vsyncpa [#allocation4], 0
    %9 = vsyncpa [#allocation7], 0
    %10 = vsyncpa [#allocation5], 0
    // Predicated region
    $region2: #{tpu_custom_call.1} parent=1 // pred_check
      _
    $region3: #{tpu_custom_call.1} parent=1 // pred_check_branch
      %12 = sbr.rel (0) target = $region5
    $region4: #{tpu_custom_call.1} parent=1 // pred_region
      %s14 = ssub.s32 128, 128
      %15 = vsyncadd [#allocation4], %s14
      %s16 = sshll.u32 [#allocation3], 4
      %s17 = int_to_ptr.vmem [resolvable:$true] %s16
      %22 = dma.hbm_to_vmem [thread:$0]  %s0, 128, %s17, [#allocation4], 64, 64, 4
    $region5: #{tpu_custom_call.1} parent=1 // pred_fallthru
      _
    // Predicated region
    $region6: #{tpu_custom_call.1} parent=1 // pred_check
      _
    $region7: #{tpu_custom_call.1} parent=1 // pred_check_branch
      %24 = sbr.rel (0) target = $region9
    $region8: #{tpu_custom_call.1} parent=1 // pred_region
      %s26 = ssub.s32 256, 256
      %27 = vsyncadd [#allocation7], %s26
      %s28 = sshll.u32 [#allocation6], 4
      %s29 = int_to_ptr.vmem [resolvable:$true] %s28
      %34 = dma.hbm_to_vmem [thread:$0]  %s1, 256, %s29, [#allocation7], 64, 64, 4
    $region9: #{tpu_custom_call.1} parent=1 // pred_fallthru
      _
    // Predicated region
    $region10: #{tpu_custom_call.1} parent=1 // pred_check
      _
    $region11: #{tpu_custom_call.1} parent=1 // pred_check_branch
      %36 = sbr.rel (0) target = $region13
    $region12: #{tpu_custom_call.1} parent=1 // pred_region
      _
    $region13: #{tpu_custom_call.1} parent=1 // pred_fallthru
      _
    // Predicated region
    $region14: #{tpu_custom_call.1} parent=1 // pred_check
      _
    $region15: #{tpu_custom_call.1} parent=1 // pred_check_branch
      %38 = sbr.rel (0) target = $region17
    $region16: #{tpu_custom_call.1} parent=1 // pred_region
      %39 = dma.done [#allocation4], 128
    $region17: #{tpu_custom_call.1} parent=1 // pred_fallthru
      _
    // Predicated region
    $region18: #{tpu_custom_call.1} parent=1 // pred_check
      _
    $region19: #{tpu_custom_call.1} parent=1 // pred_check_branch
      %41 = sbr.rel (0) target = $region21
    $region20: #{tpu_custom_call.1} parent=1 // pred_region
      %42 = dma.done [#allocation7], 256
    $region21: #{tpu_custom_call.1} parent=1 // pred_fallthru
      _
    %p44 = scmp.eq.s32.totalorder 0, 0
    // Predicated region
    $region22: #{tpu_custom_call.1} parent=1 // pred_check
      %p45 = pneg %p44
    $region23: #{tpu_custom_call.1} parent=1 // pred_check_branch
      %47 = sbr.rel (%p45) target = $region25
    $region24: #{tpu_custom_call.1} parent=1 // pred_region
      %48 = vst [vmem:[#allocation2] sm:$0xff] 0.0
      %49 = vst [vmem:[#allocation2 + $0x8] sm:$0xff] 0.0
    $region25: #{tpu_custom_call.1} parent=1 // pred_fallthru
      _
    %v50 = vld [vmem:[#allocation2] sm:$0xff]
    %v51 = vld [vmem:[#allocation2 + $0x8] sm:$0xff]
    %v52 = vld [vmem:[#allocation3] sm:$0xf]
    %v53 = vld [vmem:[#allocation3 + $0x4] sm:$0xf]
    %v54 = vld [vmem:[#allocation6] sm:$0xf]
    %v55 = vld [vmem:[#allocation6 + $0x4] sm:$0xf]
    %v56 = vld [vmem:[#allocation6 + $0x8] sm:$0xf]
    %v57 = vld [vmem:[#allocation6 + $0xc] sm:$0xf]
    %v60 = vunpack.c.l.b16 %v52
    %v61 = vunpack.c.l.b16 %v53
    %v62 = vpack.c.b16 %v61, %v60
    %v67 = vunpack.c.l.b16 %v54
    %v68 = vunpack.c.l.b16 %v55
    %v69 = vunpack.c.l.b16 %v56
    %v70 = vunpack.c.l.b16 %v57
    %v71 = vpack.c.b16 %v68, %v67
    %v72 = vpack.c.b16 %v70, %v69
    %vm75 = vcmask 261120
    %v77 = vsel %vm75, %v62, 0
    %79 = vmatprep.subr.bf16.mxu0 0
    %80 = vmatpush1.bf16.msra.mxu0 %v71
    %81 = vmatprep.subr.bf16.mxu0 0
    %82 = vmatpush1.bf16.msra.mxu0 %v72
    %83 = vmatprep.subr.bf16.mxu0 0
    %84 = vmatpush1.bf16.msra.mxu0 0
    %85 = vmatprep.subr.bf16.mxu0 0
    %86 = vmatpush1.bf16.msra.mxu0 0
    %87 = vmatprep.subr.bf16.mxu0 0
    %88 = vmatpush1.bf16.msra.mxu0 0
    %89 = vmatprep.subr.bf16.mxu0 0
    %90 = vmatpush1.bf16.msra.mxu0 0
    %91 = vmatprep.subr.bf16.mxu0 0
    %92 = vmatpush1.bf16.msra.mxu0 0
    %93 = vmatprep.subr.bf16.mxu0 0
    %94 = vmatpush1.bf16.msra.mxu0 0
    %95 = vmatprep.subr.bf16.mxu0 0
    %96 = vmatpush1.bf16.msra.mxu0 0
    %97 = vmatprep.subr.bf16.mxu0 0
    %98 = vmatpush1.bf16.msra.mxu0 0
    %99 = vmatprep.subr.bf16.mxu0 0
    %100 = vmatpush1.bf16.msra.mxu0 0
    %101 = vmatprep.subr.bf16.mxu0 0
    %102 = vmatpush1.bf16.msra.mxu0 0
    %103 = vmatprep.subr.bf16.mxu0 0
    %104 = vmatpush1.bf16.msra.mxu0 0
    %105 = vmatprep.subr.bf16.mxu0 0
    %106 = vmatpush1.bf16.msra.mxu0 0
    %107 = vmatprep.subr.bf16.mxu0 0
    %108 = vmatpush1.bf16.msra.mxu0 0
    %109 = vmatprep.subr.bf16.mxu0 0
    %110 = vmatpush1.bf16.msra.mxu0 0
    %111 = vmatprep.mubr.bf16.mxu0 0
    %112 = vmatmul.mubr.bf16.gmra.mrb[0].mxu0 %v77
    %v113 = vpop.f32.mrb[0].mxu0
    %v114 = vadd.f32 0.0, %v113
    %v115 = vpop.f32.mrb[0].mxu0
    %v116 = vpop.f32.mrb[0].mxu0
    %v117 = vadd.f32 0.0, %v116
    %v118 = vpop.f32.mrb[0].mxu0
    %119 = vdwg.mxu0
    %v120 = vadd.f32 %v50, %v114
    %v121 = vadd.f32 %v51, %v117
    %122 = vst [vmem:[#allocation2] sm:$0xff] %v120
    %123 = vst [vmem:[#allocation2 + $0x8] sm:$0xff] %v121
    // Predicated region
    $region26: #{tpu_custom_call.1} parent=1 // pred_check
      %p124 = pneg %p44
    $region27: #{tpu_custom_call.1} parent=1 // pred_check_branch
      %126 = sbr.rel (%p124) target = $region29
    $region28: #{tpu_custom_call.1} parent=1 // pred_region
      %v127 = vld [vmem:[#allocation2] sm:$0xff]
      %v128 = vld [vmem:[#allocation2 + $0x8] sm:$0xff]
      %v129 = vld [vmem:[%s2] sm:$0x1]
      %v131 = vlaneseq
      %v132 = vshrl.u32 %v131, 7
      %v133 = vsub.s32 0, %v132
      %v134 = vrot.slane %v129, %v133
      %v136 = vadd.f32 %v127, %v134
      %v137 = vadd.f32 %v128, %v134
      %v138 = vmul.f32 %v136, 0.5
      %v139 = vmul.f32 %v137, 0.5
      %v140 = vmul.f32 %v136, 0.70710677
      %v141 = vmul.f32 %v137, 0.70710677
      %v142 = verf.f32.pop %v140
      %v143 = verf.f32.pop %v141
      %v144 = vadd.f32 %v142, 1.0
      %v145 = vadd.f32 %v143, 1.0
      %v146 = vmul.f32 %v138, %v144
      %v147 = vmul.f32 %v139, %v145
      %v148 = vpack.c.bf16 %v147, %v146
      %v150 = vunpack.c.l.b16 %v148
      %v151 = vunpack.c.h.b16 %v148
      %v152 = vpack.c.b16 %v150, %v150
      %v153 = vpack.c.b16 %v151, %v151
      %156 = vst [vmem:[#allocation8] sm:$0xf] %v152
      %157 = vst [vmem:[#allocation8 + $0x4] sm:$0xf] %v153
    $region29: #{tpu_custom_call.1} parent=1 // pred_fallthru
      _
    // Predicated region
    $region30: #{tpu_custom_call.1} parent=1 // pred_check
      _
    $region31: #{tpu_custom_call.1} parent=1 // pred_check_branch
      %159 = sbr.rel (0) target = $region33
    $region32: #{tpu_custom_call.1} parent=1 // pred_region
      %s161 = ssub.s32 128, 128
      %162 = vsyncadd [#allocation5], %s161
      %s163 = sshll.u32 [#allocation8], 4
      %s164 = int_to_ptr.vmem [resolvable:$true] %s163
      %169 = dma.vmem_to_hbm [thread:$0]  %s164, 128, %s3, [#allocation5], 64, 64, 4
    $region33: #{tpu_custom_call.1} parent=1 // pred_fallthru
      _
    // Predicated region
    $region34: #{tpu_custom_call.1} parent=1 // pred_check
      _
    $region35: #{tpu_custom_call.1} parent=1 // pred_check_branch
      %171 = sbr.rel (0) target = $region37
    $region36: #{tpu_custom_call.1} parent=1 // pred_region
      %172 = dma.done [#allocation5], 128
    $region37: #{tpu_custom_call.1} parent=1 // pred_fallthru
      _
    %173 = vsyncpa [#allocation4], 1
    %174 = vsyncpa [#allocation7], 1
    %175 = vsyncpa [#allocation5], 1

</llo_original>
